<compile_context>
chip_gen: v5e
topology: v5e:2x2
jax: 0.10.0
libtpu: 0.0.40
codegen_flags: <defaults>
</compile_context>

<pallas_src>
import jax
import jax.numpy as jnp
from jax.experimental import pallas as pl
from jax.experimental.pallas import tpu as pltpu


# -----------------------------------------------------------------------------
# Kernel: activations are (features, batch_tile); weights are (out, in).
# -----------------------------------------------------------------------------
def _mlp_kernel(x_ref,
                w1_ref, b1_ref,
                w2_ref, b2_ref,
                w3_ref, b3_ref,
                w4_ref, b4_ref,
                out_ref):
    x = x_ref[...]                                                  # (8, TB)

    # Linear(7->64) + ReLU   (BN1 is folded into W2/b2)
    h = jnp.dot(w1_ref[...], x, preferred_element_type=jnp.float32) + b1_ref[...]
    h = jnp.maximum(h, 0.0)                                          # (64, TB)

    # Linear(64->32) + ReLU  (BN2 folded into W3/b3)
    h = jnp.dot(w2_ref[...], h, preferred_element_type=jnp.float32) + b2_ref[...]
    h = jnp.maximum(h, 0.0)                                          # (32, TB)

    # Linear(32->16) + ReLU  (BN3 folded into W4/b4)
    h = jnp.dot(w3_ref[...], h, preferred_element_type=jnp.float32) + b3_ref[...]
    h = jnp.maximum(h, 0.0)                                          # (16, TB)

    # Head Linear(16->7) with residual_weight pre-folded, then residual add.
    corr = jnp.dot(w4_ref[...], h, preferred_element_type=jnp.float32) + b4_ref[...]
    out_ref[...] = x + corr                                          # (8, TB)


# -----------------------------------------------------------------------------
# Host-side parameter folding / packing for the kernel.
# -----------------------------------------------------------------------------
def fold_params(p, eps=1e-5):
    """Fold eval-mode BN + residual_weight into the Linears; transpose & pad."""
    def bn_affine(i):
        s = p[f"g{i}"] / jnp.sqrt(p[f"v{i}"] + eps)
        t = p[f"be{i}"] - p[f"m{i}"] * s
        return s, t

    s1, t1 = bn_affine(1)
    s2, t2 = bn_affine(2)
    s3, t3 = bn_affine(3)
    rw = p["rw"]

    # Row-major (in, out) folding: y = relu(x@W1+b1); next layer sees y*s+t.
    w1 = p["w1"]
    b1 = p["b1"]
    w2 = s1[:, None] * p["w2"]
    b2 = t1 @ p["w2"] + p["b2"]
    w3 = s2[:, None] * p["w3"]
    b3 = t2 @ p["w3"] + p["b3"]
    w4 = rw * (s3[:, None] * p["w4"])          # residual_weight folded in
    b4 = rw * (t3 @ p["w4"] + p["b4"])

    f_in = w1.shape[0]        # 7
    f_out = w4.shape[1]       # 7
    fp = 8                    # padded feature dim (sublane-aligned)

    h1 = w1.shape[1]
    kw1 = jnp.zeros((h1, fp), jnp.float32).at[:, :f_in].set(w1.T)      # (64, 8)
    kb1 = b1.reshape(h1, 1).astype(jnp.float32)                         # (64, 1)
    kw2 = w2.T.astype(jnp.float32)                                       # (32, 64)
    kb2 = b2.reshape(-1, 1).astype(jnp.float32)                          # (32, 1)
    kw3 = w3.T.astype(jnp.float32)                                       # (16, 32)
    kb3 = b3.reshape(-1, 1).astype(jnp.float32)                          # (16, 1)
    kw4 = jnp.zeros((fp, w4.shape[0]), jnp.float32).at[:f_out, :].set(w4.T)  # (8, 16)
    kb4 = jnp.zeros((fp, 1), jnp.float32).at[:f_out, 0].set(b4)          # (8, 1)

    return dict(w1=kw1, b1=kb1, w2=kw2, b2=kb2,
                w3=kw3, b3=kb3, w4=kw4, b4=kb4)


# -----------------------------------------------------------------------------
# Wrapper: transpose to (features, batch), pad, tile the batch on the grid.
# -----------------------------------------------------------------------------
def torque_correction_forward(x, params, *, tb=None, eps=1e-5):
    """x: (B, 7) float32. params: raw module params (see init_params)."""
    B, F = x.shape
    fp = 8  # padded feature dim

    kp = fold_params(params, eps=eps)

    if tb is None:
        # Biggest lane-dense tile up to 1024 columns; single step for small B.
        tb = 128 * max(1, min(8, pl.cdiv(B, 128)))
    b_pad = tb * pl.cdiv(B, tb)

    # Feature-major, zero-padded input: (8, B_pad); batch on the lane axis.
    x_t = jnp.zeros((fp, b_pad), jnp.float32).at[:F, :B].set(x.T.astype(jnp.float32))

    x_map = lambda i: (0, i)        # batch tile i
    const = lambda i: (0, 0)        # weights resident (fetched once)

    in_specs = [
        pl.BlockSpec((fp, tb), x_map),
        pl.BlockSpec(kp["w1"].shape, const),
        pl.BlockSpec(kp["b1"].shape, const),
        pl.BlockSpec(kp["w2"].shape, const),
        pl.BlockSpec(kp["b2"].shape, const),
        pl.BlockSpec(kp["w3"].shape, const),
        pl.BlockSpec(kp["b3"].shape, const),
        pl.BlockSpec(kp["w4"].shape, const),
        pl.BlockSpec(kp["b4"].shape, const),
    ]
    out_spec = pl.BlockSpec((fp, tb), x_map)

    out_t = pl.pallas_call(
        _mlp_kernel,
        out_shape=jax.ShapeDtypeStruct((fp, b_pad), jnp.float32),
        grid_spec=pltpu.PrefetchScalarGridSpec(
            num_scalar_prefetch=0,
            grid=(b_pad // tb,),
            in_specs=in_specs,
            out_specs=out_spec,
        ),
        compiler_params=pltpu.CompilerParams(
            dimension_semantics=("parallel",)),   # shard batch tiles across TCs
    )(x_t, kp["w1"], kp["b1"], kp["w2"], kp["b2"],
      kp["w3"], kp["b3"], kp["w4"], kp["b4"])

    # Slice off feature pad + batch pad, back to (B, 7).
    return out_t[:F, :B].T


# -----------------------------------------------------------------------------
# Deterministic synthetic parameters with the module's shapes (raw, unfolded).
# -----------------------------------------------------------------------------
def init_params(key, input_size=7, hidden_sizes=(64, 32, 16)):
    sizes = [input_size] + list(hidden_sizes) + [input_size]
    n_linear = len(sizes) - 1
    keys = jax.random.split(key, 6 * n_linear)

    p = {}
    ki = 0
    for li in range(n_linear):
        fi, fo = sizes[li], sizes[li + 1]
        p[f"w{li + 1}"] = 0.1 * jax.random.normal(keys[ki], (fi, fo), jnp.float32); ki += 1
        p[f"b{li + 1}"] = 0.05 * jax.random.normal(keys[ki], (fo,), jnp.float32); ki += 1
        if li < n_linear - 1:  # BatchNorm follows every hidden Linear
            p[f"g{li + 1}"] = 1.0 + 0.1 * jax.random.normal(keys[ki], (fo,), jnp.float32); ki += 1
            p[f"be{li + 1}"] = 0.05 * jax.random.normal(keys[ki], (fo,), jnp.float32); ki += 1
            # non-trivial eval-mode running stats to exercise the folding
            p[f"m{li + 1}"] = 0.1 * jax.random.normal(keys[ki], (fo,), jnp.float32); ki += 1
            p[f"v{li + 1}"] = 1.0 + 0.5 * jax.random.uniform(keys[ki], (fo,), jnp.float32); ki += 1
        else:
            ki += 4  # keep key consumption aligned

    p["rw"] = jnp.float32(0.5)   # residual_weight = nn.Parameter(tensor([0.5]))
    return p


# -----------------------------------------------------------------------------
# Pure-JAX reference mirroring the PyTorch forward (eval-mode BN, unfolded).
# -----------------------------------------------------------------------------
def reference_forward(x, p, eps=1e-5):
    h = x
    for i in (1, 2, 3):
        h = jnp.maximum(h @ p[f"w{i}"] + p[f"b{i}"], 0.0)
        h = (h - p[f"m{i}"]) / jnp.sqrt(p[f"v{i}"] + eps) * p[f"g{i}"] + p[f"be{i}"]
    corr = h @ p["w4"] + p["b4"]
    return x + p["rw"] * corr


if __name__ == "__main__":
    key = jax.random.PRNGKey(0)
    k_params, k_x = jax.random.split(key)

    batch = 200          # not a multiple of 128 -> exercises batch padding
    input_size = 7
    params = init_params(k_params, input_size=input_size)
    x = jax.random.normal(k_x, (batch, input_size), jnp.float32)

    # tb=128 -> grid of 2 batch tiles (exercises the pipelined/parallel grid).
    out = torque_correction_forward(x, params, tb=128)
    out = jax.block_until_ready(out)

    ref = reference_forward(x, params)
    assert out.shape == (batch, input_size)
    assert jnp.allclose(out, ref, atol=1e-4, rtol=1e-4), "mismatch vs reference"

    print("KERNEL_OK")
</pallas_src>

<mosaic_0001>
module attributes {stable_mosaic.version = 11 : i64} {
  func.func @_mlp_kernel(%arg0: i32, %arg1: memref<8x128xf32, #tpu.memory_space<vmem>>, %arg2: memref<64x8xf32, #tpu.memory_space<vmem>>, %arg3: memref<64x1xf32, #tpu.memory_space<vmem>>, %arg4: memref<32x64xf32, #tpu.memory_space<vmem>>, %arg5: memref<32x1xf32, #tpu.memory_space<vmem>>, %arg6: memref<16x32xf32, #tpu.memory_space<vmem>>, %arg7: memref<16x1xf32, #tpu.memory_space<vmem>>, %arg8: memref<8x16xf32, #tpu.memory_space<vmem>>, %arg9: memref<8x1xf32, #tpu.memory_space<vmem>>, %arg10: memref<8x128xf32, #tpu.memory_space<vmem>>) attributes {dimension_semantics = [#tpu.dimension_semantics<parallel>], iteration_bounds = array<i64: 2>, scalar_prefetch = 0 : i64, scratch_operands = 0 : i64, tpu.core_type = #tpu.core_type<tc>, window_params = [{transform_indices = @transform_0, window_bounds = array<i64: 8, 128>}, {pipeline_mode = #tpu.pipeline_mode<synchronous>, transform_indices = @transform_1, window_bounds = array<i64: 64, 8>}, {pipeline_mode = #tpu.pipeline_mode<synchronous>, transform_indices = @transform_2, window_bounds = array<i64: 64, 1>}, {pipeline_mode = #tpu.pipeline_mode<synchronous>, transform_indices = @transform_3, window_bounds = array<i64: 32, 64>}, {pipeline_mode = #tpu.pipeline_mode<synchronous>, transform_indices = @transform_4, window_bounds = array<i64: 32, 1>}, {pipeline_mode = #tpu.pipeline_mode<synchronous>, transform_indices = @transform_5, window_bounds = array<i64: 16, 32>}, {pipeline_mode = #tpu.pipeline_mode<synchronous>, transform_indices = @transform_6, window_bounds = array<i64: 16, 1>}, {pipeline_mode = #tpu.pipeline_mode<synchronous>, transform_indices = @transform_7, window_bounds = array<i64: 8, 16>}, {pipeline_mode = #tpu.pipeline_mode<synchronous>, transform_indices = @transform_8, window_bounds = array<i64: 8, 1>}, {transform_indices = @transform_9, window_bounds = array<i64: 8, 128>}]} {
    %c0 = arith.constant 0 : index
    %c0_0 = arith.constant 0 : index
    %0 = vector.load %arg1[%c0, %c0_0] : memref<8x128xf32, #tpu.memory_space<vmem>>, vector<8x128xf32>
    %c0_1 = arith.constant 0 : index
    %c0_2 = arith.constant 0 : index
    %1 = vector.load %arg2[%c0_1, %c0_2] : memref<64x8xf32, #tpu.memory_space<vmem>>, vector<64x8xf32>
    %cst = arith.constant dense<0.000000e+00> : vector<64x128xf32>
    %2 = tpu.matmul %1, %0, %cst {dimension_numbers = #tpu.dot_dimension_numbers<[1], [0], [0], [1], [0, 0, 1, 1], [], []>} : vector<64x8xf32>, vector<8x128xf32>, vector<64x128xf32> -> vector<64x128xf32>
    %c0_3 = arith.constant 0 : index
    %c0_4 = arith.constant 0 : index
    %3 = vector.load %arg3[%c0_3, %c0_4] : memref<64x1xf32, #tpu.memory_space<vmem>>, vector<64x1xf32>
    %4 = vector.broadcast %3 : vector<64x1xf32> to vector<64x128xf32>
    %5 = arith.addf %2, %4 : vector<64x128xf32>
    %cst_5 = arith.constant 0.000000e+00 : f32
    %6 = vector.broadcast %cst_5 : f32 to vector<64x128xf32>
    %7 = arith.maximumf %5, %6 : vector<64x128xf32>
    %c0_6 = arith.constant 0 : index
    %c0_7 = arith.constant 0 : index
    %8 = vector.load %arg4[%c0_6, %c0_7] : memref<32x64xf32, #tpu.memory_space<vmem>>, vector<32x64xf32>
    %cst_8 = arith.constant dense<0.000000e+00> : vector<32x128xf32>
    %9 = tpu.matmul %8, %7, %cst_8 {dimension_numbers = #tpu.dot_dimension_numbers<[1], [0], [0], [1], [0, 0, 1, 1], [], []>} : vector<32x64xf32>, vector<64x128xf32>, vector<32x128xf32> -> vector<32x128xf32>
    %c0_9 = arith.constant 0 : index
    %c0_10 = arith.constant 0 : index
    %10 = vector.load %arg5[%c0_9, %c0_10] : memref<32x1xf32, #tpu.memory_space<vmem>>, vector<32x1xf32>
    %11 = vector.broadcast %10 : vector<32x1xf32> to vector<32x128xf32>
    %12 = arith.addf %9, %11 : vector<32x128xf32>
    %cst_11 = arith.constant 0.000000e+00 : f32
    %13 = vector.broadcast %cst_11 : f32 to vector<32x128xf32>
    %14 = arith.maximumf %12, %13 : vector<32x128xf32>
    %c0_12 = arith.constant 0 : index
    %c0_13 = arith.constant 0 : index
    %15 = vector.load %arg6[%c0_12, %c0_13] : memref<16x32xf32, #tpu.memory_space<vmem>>, vector<16x32xf32>
    %cst_14 = arith.constant dense<0.000000e+00> : vector<16x128xf32>
    %16 = tpu.matmul %15, %14, %cst_14 {dimension_numbers = #tpu.dot_dimension_numbers<[1], [0], [0], [1], [0, 0, 1, 1], [], []>} : vector<16x32xf32>, vector<32x128xf32>, vector<16x128xf32> -> vector<16x128xf32>
    %c0_15 = arith.constant 0 : index
    %c0_16 = arith.constant 0 : index
    %17 = vector.load %arg7[%c0_15, %c0_16] : memref<16x1xf32, #tpu.memory_space<vmem>>, vector<16x1xf32>
    %18 = vector.broadcast %17 : vector<16x1xf32> to vector<16x128xf32>
    %19 = arith.addf %16, %18 : vector<16x128xf32>
    %cst_17 = arith.constant 0.000000e+00 : f32
    %20 = vector.broadcast %cst_17 : f32 to vector<16x128xf32>
    %21 = arith.maximumf %19, %20 : vector<16x128xf32>
    %c0_18 = arith.constant 0 : index
    %c0_19 = arith.constant 0 : index
    %22 = vector.load %arg8[%c0_18, %c0_19] : memref<8x16xf32, #tpu.memory_space<vmem>>, vector<8x16xf32>
    %cst_20 = arith.constant dense<0.000000e+00> : vector<8x128xf32>
    %23 = tpu.matmul %22, %21, %cst_20 {dimension_numbers = #tpu.dot_dimension_numbers<[1], [0], [0], [1], [0, 0, 1, 1], [], []>} : vector<8x16xf32>, vector<16x128xf32>, vector<8x128xf32> -> vector<8x128xf32>
    %c0_21 = arith.constant 0 : index
    %c0_22 = arith.constant 0 : index
    %24 = vector.load %arg9[%c0_21, %c0_22] : memref<8x1xf32, #tpu.memory_space<vmem>>, vector<8x1xf32>
    %25 = vector.broadcast %24 : vector<8x1xf32> to vector<8x128xf32>
    %26 = arith.addf %23, %25 : vector<8x128xf32>
    %27 = arith.addf %0, %26 : vector<8x128xf32>
    %c0_23 = arith.constant 0 : index
    %c0_24 = arith.constant 0 : index
    %28 = vector.load %arg10[%c0_23, %c0_24] : memref<8x128xf32, #tpu.memory_space<vmem>>, vector<8x128xf32>
    tpu.vector_store %arg10[%c0_23, %c0_24], %27 {strides = array<i32>} : memref<8x128xf32, #tpu.memory_space<vmem>>, vector<8x128xf32>,
    return
  }
  func.func @transform_0(%arg0: i32) -> (i32, i32) {
    %c0_i32 = arith.constant 0 : i32
    %c0_i32_0 = arith.constant 0 : i32
    return %c0_i32, %arg0 : i32, i32
  }
  func.func @transform_1(%arg0: i32) -> (i32, i32) {
    %c0_i32 = arith.constant 0 : i32
    %c0_i32_0 = arith.constant 0 : i32
    %c0_i32_1 = arith.constant 0 : i32
    return %c0_i32, %c0_i32_0 : i32, i32
  }
  func.func @transform_2(%arg0: i32) -> (i32, i32) {
    %c0_i32 = arith.constant 0 : i32
    %c0_i32_0 = arith.constant 0 : i32
    %c0_i32_1 = arith.constant 0 : i32
    return %c0_i32, %c0_i32_0 : i32, i32
  }
  func.func @transform_3(%arg0: i32) -> (i32, i32) {
    %c0_i32 = arith.constant 0 : i32
    %c0_i32_0 = arith.constant 0 : i32
    %c0_i32_1 = arith.constant 0 : i32
    return %c0_i32, %c0_i32_0 : i32, i32
  }
  func.func @transform_4(%arg0: i32) -> (i32, i32) {
    %c0_i32 = arith.constant 0 : i32
    %c0_i32_0 = arith.constant 0 : i32
    %c0_i32_1 = arith.constant 0 : i32
    return %c0_i32, %c0_i32_0 : i32, i32
  }
  func.func @transform_5(%arg0: i32) -> (i32, i32) {
    %c0_i32 = arith.constant 0 : i32
    %c0_i32_0 = arith.constant 0 : i32
    %c0_i32_1 = arith.constant 0 : i32
    return %c0_i32, %c0_i32_0 : i32, i32
  }
  func.func @transform_6(%arg0: i32) -> (i32, i32) {
    %c0_i32 = arith.constant 0 : i32
    %c0_i32_0 = arith.constant 0 : i32
    %c0_i32_1 = arith.constant 0 : i32
    return %c0_i32, %c0_i32_0 : i32, i32
  }
  func.func @transform_7(%arg0: i32) -> (i32, i32) {
    %c0_i32 = arith.constant 0 : i32
    %c0_i32_0 = arith.constant 0 : i32
    %c0_i32_1 = arith.constant 0 : i32
    return %c0_i32, %c0_i32_0 : i32, i32
  }
  func.func @transform_8(%arg0: i32) -> (i32, i32) {
    %c0_i32 = arith.constant 0 : i32
    %c0_i32_0 = arith.constant 0 : i32
    %c0_i32_1 = arith.constant 0 : i32
    return %c0_i32, %c0_i32_0 : i32, i32
  }
  func.func @transform_9(%arg0: i32) -> (i32, i32) {
    %c0_i32 = arith.constant 0 : i32
    %c0_i32_0 = arith.constant 0 : i32
    return %c0_i32, %arg0 : i32, i32
  }
}

</mosaic_0001>

<llo_original>
// kernel: tpu_custom_call.1
$region0: #{tpu_custom_call.1}
  #allocation0 [shape = 'u32[]', space=smem, size = 0x4, offset = 0x4, fixed_abs, tag = 'smem constant byte address 0x4 - core index']
  #allocation1 [shape = 'u32[72,128]{1,0:T(1,128)}', space=vmem, size = 0x9000, scoped, tag = 'internal scratch']
  %s0 = inlined_call_operand.vmem [shape: f32[8,256], index: 0, kind: input, shape index: {}]
  %s1 = inlined_call_operand.vmem [shape: f32[64,8], index: 1, kind: input, shape index: {}]
  %s2 = inlined_call_operand.vmem [shape: f32[64,1], index: 2, kind: input, shape index: {}]
  %s3 = inlined_call_operand.vmem [shape: f32[32,64], index: 3, kind: input, shape index: {}]
  %s4 = inlined_call_operand.vmem [shape: f32[32,1], index: 4, kind: input, shape index: {}]
  %s5 = inlined_call_operand.vmem [shape: f32[16,32], index: 5, kind: input, shape index: {}]
  %s6 = inlined_call_operand.vmem [shape: f32[16,1], index: 6, kind: input, shape index: {}]
  %s7 = inlined_call_operand.vmem [shape: f32[8,16], index: 7, kind: input, shape index: {}]
  %s8 = inlined_call_operand.vmem [shape: f32[8,1], index: 8, kind: input, shape index: {}]
  %s9 = inlined_call_operand.hbm [shape: f32[8,256], index: 9, kind: output, shape index: {}]
  %s10 = sld [smem:[#allocation0]]
  $region69: #{tpu_custom_call.1} parent=0
    _
  %s12 = ssub.s32 1, %s10
  %s13 = scalar_select 0, %s12, %s10
  $region1: #{tpu_custom_call.1} parent=0
    #allocation2 [shape = 'u8[8192]{0}', space=vmem, size = 0x2000, scoped, tag = 'output window, operand 0']
    #allocation3 [shape = 's32[2]{0}', space=sflag, size = 0x8, scoped, tag = 'scoped memory for tpu_custom_call.1']
    %14 = vsyncpa [#allocation3], 0
    %s15 = scalar_lea.sflag [#allocation3], 1
    %16 = vsyncpa %s15, 0
    loop: start=0, step=1, limit=4
    $region2: #{tpu_custom_call.1} parent=1 // loop_pre_header
      _
    $region3: #{tpu_custom_call.1} parent=1 // loop_header
      %s18 = sphi 0, %s22
      %p19 = scmp.ge.s32.totalorder %s18, 4
      %s28 = sphi 0, %s30
      %s31 = sphi 0, %s28
      %s32 = sphi 0, %s31
      %s48 = sphi 0, %s32
      %s52 = sphi 0, %s52
      %s54 = sphi 0, %s52
      %s55 = sphi 0, %s54
      %s69 = sphi 0, %s55
      %s73 = sphi 0, %s73
      %s75 = sphi 0, %s73
      %s76 = sphi 0, %s75
      %s90 = sphi 0, %s76
      %s94 = sphi 0, %s94
      %s96 = sphi 0, %s94
      %s97 = sphi 0, %s96
      %s111 = sphi 0, %s97
      %s115 = sphi 0, %s115
      %s117 = sphi 0, %s115
      %s118 = sphi 0, %s117
      %s132 = sphi 0, %s118
      %s136 = sphi 0, %s136
      %s138 = sphi 0, %s136
      %s139 = sphi 0, %s138
      %s153 = sphi 0, %s139
      %s157 = sphi 0, %s157
      %s159 = sphi 0, %s157
      %s160 = sphi 0, %s159
      %s174 = sphi 0, %s160
      %s178 = sphi 0, %s178
      %s180 = sphi 0, %s178
      %s181 = sphi 0, %s180
      %s195 = sphi 0, %s181
      %s199 = sphi 0, %s199
      %s201 = sphi 0, %s199
      %s202 = sphi 0, %s201
      %s216 = sphi 0, %s202
      %s222 = sphi 0, %s224
      %s225 = sphi 0, %s222
      %s226 = sphi 0, %s225
      %s242 = sphi 0, %s226
    $region4: #{tpu_custom_call.1} parent=1 // loop_header_branch
      %21 = sbr.rel (%p19) target = $region8
    $region5: #{tpu_custom_call.1} parent=1 // loop_body
      %s23 = ssub.s32 %s18, 1
      %s24 = ssub.s32 %s18, 2
      %s25 = sadd.s32 %s18, 1
      %s26 = ssub.s32 %s18, %s25
      %p27 = scmp.eq.s32.totalorder %s26, 0
      %s29 = sadd.s32 %s28, 1
      %s30 = scalar_select %p27, %s28, %s29
      %p33 = pneg %p27
      %p34 = scmp.eq.s32.totalorder %s18, 1
      %p35 = por %p33, %p34
      %p36 = scmp.ne.s32.totalorder %s28, %s31
      %p37 = scmp.eq.s32.totalorder %s18, 0
      %p38 = por %p36, %p37
      %p39 = scmp.ne.s32.totalorder %s28, %s31
      %p40 = scmp.eq.s32.totalorder %s23, 1
      %p41 = por %p39, %p40
      %p42 = scmp.ne.s32.totalorder %s31, %s32
      %p43 = scmp.eq.s32.totalorder %s23, 0
      %p44 = por %p42, %p43
      %p45 = scmp.ne.s32.totalorder %s31, %s32
      %p46 = scmp.eq.s32.totalorder %s24, 1
      %p47 = por %p45, %p46
      %p49 = scmp.ne.s32.totalorder %s32, %s48
      %p50 = scmp.eq.s32.totalorder %s24, 0
      %p51 = por %p49, %p50
      %s53 = sadd.s32 %s52, 1
      %p56 = scmp.eq.s32.totalorder %s18, 1
      %p57 = scmp.ne.s32.totalorder %s52, %s54
      %p58 = scmp.eq.s32.totalorder %s18, 0
      %p59 = por %p57, %p58
      %p60 = scmp.ne.s32.totalorder %s52, %s54
      %p61 = scmp.eq.s32.totalorder %s23, 1
      %p62 = por %p60, %p61
      %p63 = scmp.ne.s32.totalorder %s54, %s55
      %p64 = scmp.eq.s32.totalorder %s23, 0
      %p65 = por %p63, %p64
      %p66 = scmp.ne.s32.totalorder %s54, %s55
      %p67 = scmp.eq.s32.totalorder %s24, 1
      %p68 = por %p66, %p67
      %p70 = scmp.ne.s32.totalorder %s55, %s69
      %p71 = scmp.eq.s32.totalorder %s24, 0
      %p72 = por %p70, %p71
      %s74 = sadd.s32 %s73, 1
      %p77 = scmp.eq.s32.totalorder %s18, 1
      %p78 = scmp.ne.s32.totalorder %s73, %s75
      %p79 = scmp.eq.s32.totalorder %s18, 0
      %p80 = por %p78, %p79
      %p81 = scmp.ne.s32.totalorder %s73, %s75
      %p82 = scmp.eq.s32.totalorder %s23, 1
      %p83 = por %p81, %p82
      %p84 = scmp.ne.s32.totalorder %s75, %s76
      %p85 = scmp.eq.s32.totalorder %s23, 0
      %p86 = por %p84, %p85
      %p87 = scmp.ne.s32.totalorder %s75, %s76
      %p88 = scmp.eq.s32.totalorder %s24, 1
      %p89 = por %p87, %p88
      %p91 = scmp.ne.s32.totalorder %s76, %s90
      %p92 = scmp.eq.s32.totalorder %s24, 0
      %p93 = por %p91, %p92
      %s95 = sadd.s32 %s94, 1
      %p98 = scmp.eq.s32.totalorder %s18, 1
      %p99 = scmp.ne.s32.totalorder %s94, %s96
      %p100 = scmp.eq.s32.totalorder %s18, 0
      %p101 = por %p99, %p100
      %p102 = scmp.ne.s32.totalorder %s94, %s96
      %p103 = scmp.eq.s32.totalorder %s23, 1
      %p104 = por %p102, %p103
      %p105 = scmp.ne.s32.totalorder %s96, %s97
      %p106 = scmp.eq.s32.totalorder %s23, 0
      %p107 = por %p105, %p106
      %p108 = scmp.ne.s32.totalorder %s96, %s97
      %p109 = scmp.eq.s32.totalorder %s24, 1
      %p110 = por %p108, %p109
      %p112 = scmp.ne.s32.totalorder %s97, %s111
      %p113 = scmp.eq.s32.totalorder %s24, 0
      %p114 = por %p112, %p113
      %s116 = sadd.s32 %s115, 1
      %p119 = scmp.eq.s32.totalorder %s18, 1
      %p120 = scmp.ne.s32.totalorder %s115, %s117
      %p121 = scmp.eq.s32.totalorder %s18, 0
      %p122 = por %p120, %p121
      %p123 = scmp.ne.s32.totalorder %s115, %s117
      %p124 = scmp.eq.s32.totalorder %s23, 1
      %p125 = por %p123, %p124
      %p126 = scmp.ne.s32.totalorder %s117, %s118
      %p127 = scmp.eq.s32.totalorder %s23, 0
      %p128 = por %p126, %p127
      %p129 = scmp.ne.s32.totalorder %s117, %s118
      %p130 = scmp.eq.s32.totalorder %s24, 1
      %p131 = por %p129, %p130
      %p133 = scmp.ne.s32.totalorder %s118, %s132
      %p134 = scmp.eq.s32.totalorder %s24, 0
      %p135 = por %p133, %p134
      %s137 = sadd.s32 %s136, 1
      %p140 = scmp.eq.s32.totalorder %s18, 1
      %p141 = scmp.ne.s32.totalorder %s136, %s138
      %p142 = scmp.eq.s32.totalorder %s18, 0
      %p143 = por %p141, %p142
      %p144 = scmp.ne.s32.totalorder %s136, %s138
      %p145 = scmp.eq.s32.totalorder %s23, 1
      %p146 = por %p144, %p145
      %p147 = scmp.ne.s32.totalorder %s138, %s139
      %p148 = scmp.eq.s32.totalorder %s23, 0
      %p149 = por %p147, %p148
      %p150 = scmp.ne.s32.totalorder %s138, %s139
      %p151 = scmp.eq.s32.totalorder %s24, 1
      %p152 = por %p150, %p151
      %p154 = scmp.ne.s32.totalorder %s139, %s153
      %p155 = scmp.eq.s32.totalorder %s24, 0
      %p156 = por %p154, %p155
      %s158 = sadd.s32 %s157, 1
      %p161 = scmp.eq.s32.totalorder %s18, 1
      %p162 = scmp.ne.s32.totalorder %s157, %s159
      %p163 = scmp.eq.s32.totalorder %s18, 0
      %p164 = por %p162, %p163
      %p165 = scmp.ne.s32.totalorder %s157, %s159
      %p166 = scmp.eq.s32.totalorder %s23, 1
      %p167 = por %p165, %p166
      %p168 = scmp.ne.s32.totalorder %s159, %s160
      %p169 = scmp.eq.s32.totalorder %s23, 0
      %p170 = por %p168, %p169
      %p171 = scmp.ne.s32.totalorder %s159, %s160
      %p172 = scmp.eq.s32.totalorder %s24, 1
      %p173 = por %p171, %p172
      %p175 = scmp.ne.s32.totalorder %s160, %s174
      %p176 = scmp.eq.s32.totalorder %s24, 0
      %p177 = por %p175, %p176
      %s179 = sadd.s32 %s178, 1
      %p182 = scmp.eq.s32.totalorder %s18, 1
      %p183 = scmp.ne.s32.totalorder %s178, %s180
      %p184 = scmp.eq.s32.totalorder %s18, 0
      %p185 = por %p183, %p184
      %p186 = scmp.ne.s32.totalorder %s178, %s180
      %p187 = scmp.eq.s32.totalorder %s23, 1
      %p188 = por %p186, %p187
      %p189 = scmp.ne.s32.totalorder %s180, %s181
      %p190 = scmp.eq.s32.totalorder %s23, 0
      %p191 = por %p189, %p190
      %p192 = scmp.ne.s32.totalorder %s180, %s181
      %p193 = scmp.eq.s32.totalorder %s24, 1
      %p194 = por %p192, %p193
      %p196 = scmp.ne.s32.totalorder %s181, %s195
      %p197 = scmp.eq.s32.totalorder %s24, 0
      %p198 = por %p196, %p197
      %s200 = sadd.s32 %s199, 1
      %p203 = scmp.eq.s32.totalorder %s18, 1
      %p204 = scmp.ne.s32.totalorder %s199, %s201
      %p205 = scmp.eq.s32.totalorder %s18, 0
      %p206 = por %p204, %p205
      %p207 = scmp.ne.s32.totalorder %s199, %s201
      %p208 = scmp.eq.s32.totalorder %s23, 1
      %p209 = por %p207, %p208
      %p210 = scmp.ne.s32.totalorder %s201, %s202
      %p211 = scmp.eq.s32.totalorder %s23, 0
      %p212 = por %p210, %p211
      %p213 = scmp.ne.s32.totalorder %s201, %s202
      %p214 = scmp.eq.s32.totalorder %s24, 1
      %p215 = por %p213, %p214
      %p217 = scmp.ne.s32.totalorder %s202, %s216
      %p218 = scmp.eq.s32.totalorder %s24, 0
      %p219 = por %p217, %p218
      %s220 = ssub.s32 %s18, %s25
      %p221 = scmp.eq.s32.totalorder %s220, 0
      %s223 = sadd.s32 %s222, 1
      %s224 = scalar_select %p221, %s222, %s223
      %p227 = pneg %p221
      %p228 = scmp.eq.s32.totalorder %s18, 1
      %p229 = por %p227, %p228
      %p230 = scmp.ne.s32.totalorder %s222, %s225
      %p231 = scmp.eq.s32.totalorder %s18, 0
      %p232 = por %p230, %p231
      %p233 = scmp.ne.s32.totalorder %s222, %s225
      %p234 = scmp.eq.s32.totalorder %s23, 1
      %p235 = por %p233, %p234
      %p236 = scmp.ne.s32.totalorder %s225, %s226
      %p237 = scmp.eq.s32.totalorder %s23, 0
      %p238 = por %p236, %p237
      %p239 = scmp.ne.s32.totalorder %s225, %s226
      %p240 = scmp.eq.s32.totalorder %s24, 1
      %p241 = por %p239, %p240
      %p243 = scmp.ne.s32.totalorder %s226, %s242
      %p244 = scmp.eq.s32.totalorder %s24, 0
      %p245 = por %p243, %p244
      %p246 = scmp.le.s32.totalorder 1, %s18
      %p247 = scmp.lt.s32.totalorder %s18, 3
      %p248 = pnand %p246, %p247
      %p249 = pneg %p248
      // Predicated region
      $region9: #{tpu_custom_call.1} parent=5 // pred_check
        _
      $region10: #{tpu_custom_call.1} parent=5 // pred_check_branch
        %251 = sbr.rel (%p248) target = $region12
      $region11: #{tpu_custom_call.1} parent=5 // pred_region
        %s252 = ssub.s32 %s18, 1
        // Predicated region
        $region13: #{tpu_custom_call.1} parent=11 // pred_check
          %p253 = pneg %p65
        $region14: #{tpu_custom_call.1} parent=11 // pred_check_branch
          %255 = sbr.rel (%p253) target = $region16
        $region15: #{tpu_custom_call.1} parent=11 // pred_region
          _
        $region16: #{tpu_custom_call.1} parent=11 // pred_fallthru
          _
        // Predicated region
        $region17: #{tpu_custom_call.1} parent=11 // pred_check
          %p256 = pneg %p86
        $region18: #{tpu_custom_call.1} parent=11 // pred_check_branch
          %258 = sbr.rel (%p256) target = $region20
        $region19: #{tpu_custom_call.1} parent=11 // pred_region
          _
        $region20: #{tpu_custom_call.1} parent=11 // pred_fallthru
          _
        // Predicated region
        $region21: #{tpu_custom_call.1} parent=11 // pred_check
          %p259 = pneg %p107
        $region22: #{tpu_custom_call.1} parent=11 // pred_check_branch
          %261 = sbr.rel (%p259) target = $region24
        $region23: #{tpu_custom_call.1} parent=11 // pred_region
          _
        $region24: #{tpu_custom_call.1} parent=11 // pred_fallthru
          _
        // Predicated region
        $region25: #{tpu_custom_call.1} parent=11 // pred_check
          %p262 = pneg %p128
        $region26: #{tpu_custom_call.1} parent=11 // pred_check_branch
          %264 = sbr.rel (%p262) target = $region28
        $region27: #{tpu_custom_call.1} parent=11 // pred_region
          _
        $region28: #{tpu_custom_call.1} parent=11 // pred_fallthru
          _
        // Predicated region
        $region29: #{tpu_custom_call.1} parent=11 // pred_check
          %p265 = pneg %p149
        $region30: #{tpu_custom_call.1} parent=11 // pred_check_branch
          %267 = sbr.rel (%p265) target = $region32
        $region31: #{tpu_custom_call.1} parent=11 // pred_region
          _
        $region32: #{tpu_custom_call.1} parent=11 // pred_fallthru
          _
        // Predicated region
        $region33: #{tpu_custom_call.1} parent=11 // pred_check
          %p268 = pneg %p170
        $region34: #{tpu_custom_call.1} parent=11 // pred_check_branch
          %270 = sbr.rel (%p268) target = $region36
        $region35: #{tpu_custom_call.1} parent=11 // pred_region
          _
        $region36: #{tpu_custom_call.1} parent=11 // pred_fallthru
          _
        // Predicated region
        $region37: #{tpu_custom_call.1} parent=11 // pred_check
          %p271 = pneg %p191
        $region38: #{tpu_custom_call.1} parent=11 // pred_check_branch
          %273 = sbr.rel (%p271) target = $region40
        $region39: #{tpu_custom_call.1} parent=11 // pred_region
          _
        $region40: #{tpu_custom_call.1} parent=11 // pred_fallthru
          _
        // Predicated region
        $region41: #{tpu_custom_call.1} parent=11 // pred_check
          %p274 = pneg %p212
        $region42: #{tpu_custom_call.1} parent=11 // pred_check_branch
          %276 = sbr.rel (%p274) target = $region44
        $region43: #{tpu_custom_call.1} parent=11 // pred_region
          _
        $region44: #{tpu_custom_call.1} parent=11 // pred_fallthru
          _
      $region12: #{tpu_custom_call.1} parent=5 // pred_fallthru
        _
      %p277 = scmp.lt.s32.totalorder %s18, 2
      // Predicated region
      $region45: #{tpu_custom_call.1} parent=5 // pred_check
        %p278 = pneg %p277
      $region46: #{tpu_custom_call.1} parent=5 // pred_check_branch
        %280 = sbr.rel (%p278) target = $region48
      $region47: #{tpu_custom_call.1} parent=5 // pred_region
        // Predicated region
        $region49: #{tpu_custom_call.1} parent=47 // pred_check
          %p281 = pneg %p38
        $region50: #{tpu_custom_call.1} parent=47 // pred_check_branch
          %283 = sbr.rel (%p281) target = $region52
        $region51: #{tpu_custom_call.1} parent=47 // pred_region
          %p284 = scmp.lt.s32.totalorder %s18, 1
          %s285 = scalar_select %p284, %s18, 1
          %s286 = smul.addr %s285, 8
          %s287 = scalar_lea.vmem %s0, %s286
        $region52: #{tpu_custom_call.1} parent=47 // pred_fallthru
          _
      $region48: #{tpu_custom_call.1} parent=5 // pred_fallthru
        _
      %p288 = scmp.le.s32.totalorder 1, %s18
      %p289 = scmp.lt.s32.totalorder %s18, 3
      %p290 = pnand %p288, %p289
      %p291 = pneg %p290
      // Predicated region
      $region53: #{tpu_custom_call.1} parent=5 // pred_check
        _
      $region54: #{tpu_custom_call.1} parent=5 // pred_check_branch
        %293 = sbr.rel (%p290) target = $region56
      $region55: #{tpu_custom_call.1} parent=5 // pred_region
        %s294 = ssub.s32 %s18, 1
        %p295 = scmp.lt.s32.totalorder %s23, 1
        %s296 = scalar_select %p295, %s23, 1
        %s297 = smul.addr %s296, 8
        %s298 = scalar_lea.vmem %s0, %s297
        %p299 = pneg %p44
        %p300 = pneg %p41
        %p301 = pneg %p65
        %p302 = pneg %p62
        %p303 = pneg %p86
        %p304 = pneg %p83
        %p305 = pneg %p107
        %p306 = pneg %p104
        %p307 = pneg %p128
        %p308 = pneg %p125
        %p309 = pneg %p149
        %p310 = pneg %p146
        %p311 = pneg %p170
        %p312 = pneg %p167
        %p313 = pneg %p191
        %p314 = pneg %p188
        %p315 = pneg %p212
        %p316 = pneg %p209
        %p317 = pneg %p238
        %p318 = pneg %p235
        %s319 = sand.u32 %s225, 1
        %s320 = scalar_lea.sflag [#allocation3], %s319
        %s321 = sand.u32 %s225, 1
        %s322 = smul.addr %s321, 8
        %s323 = scalar_lea.vmem [#allocation2], %s322
        %p324 = scmp.lt.s32.totalorder %s23, 1
        %s325 = scalar_select %p324, %s23, 1
        %s326 = smul.addr %s325, 8
        %s327 = scalar_lea.vmem %s0, %s326
        %v328 = vld [vmem:[%s327] sm:$0xff]
        %v329 = vld [vmem:[%s1] sm:$0xff]
        %v330 = vld [vmem:[%s1 + $0x8] sm:$0xff]
        %v331 = vld [vmem:[%s1 + $0x10] sm:$0xff]
        %v332 = vld [vmem:[%s1 + $0x18] sm:$0xff]
        %v333 = vld [vmem:[%s1 + $0x20] sm:$0xff]
        %v334 = vld [vmem:[%s1 + $0x28] sm:$0xff]
        %v335 = vld [vmem:[%s1 + $0x30] sm:$0xff]
        %v336 = vld [vmem:[%s1 + $0x38] sm:$0xff]
        %v337 = vld [vmem:[%s2] sm:$0xff]
        %v338 = vld [vmem:[%s2 + $0x8] sm:$0xff]
        %v339 = vld [vmem:[%s2 + $0x10] sm:$0xff]
        %v340 = vld [vmem:[%s2 + $0x18] sm:$0xff]
        %v341 = vld [vmem:[%s2 + $0x20] sm:$0xff]
        %v342 = vld [vmem:[%s2 + $0x28] sm:$0xff]
        %v343 = vld [vmem:[%s2 + $0x30] sm:$0xff]
        %v344 = vld [vmem:[%s2 + $0x38] sm:$0xff]
        %346 = vset.pattern.permute.xlu0 0
        %347 = vperm.xlu0 %346, %v337
        %v348 = vpop.permute.xlu0 %347
        %351 = vset.pattern.permute.xlu0 0
        %352 = vperm.xlu0 %351, %v338
        %v353 = vpop.permute.xlu0 %352
        %356 = vset.pattern.permute.xlu0 0
        %357 = vperm.xlu0 %356, %v339
        %v358 = vpop.permute.xlu0 %357
        %361 = vset.pattern.permute.xlu0 0
        %362 = vperm.xlu0 %361, %v340
        %v363 = vpop.permute.xlu0 %362
        %366 = vset.pattern.permute.xlu0 0
        %367 = vperm.xlu0 %366, %v341
        %v368 = vpop.permute.xlu0 %367
        %371 = vset.pattern.permute.xlu0 0
        %372 = vperm.xlu0 %371, %v342
        %v373 = vpop.permute.xlu0 %372
        %376 = vset.pattern.permute.xlu0 0
        %377 = vperm.xlu0 %376, %v343
        %v378 = vpop.permute.xlu0 %377
        %381 = vset.pattern.permute.xlu0 0
        %382 = vperm.xlu0 %381, %v344
        %v383 = vpop.permute.xlu0 %382
        %vm385 = vcmask 64512
        %v387 = vsel %vm385, %v329, 0
        %v390 = vsel %vm385, %v330, 0
        %v393 = vsel %vm385, %v331, 0
        %v396 = vsel %vm385, %v332, 0
        %v399 = vsel %vm385, %v333, 0
        %v402 = vsel %vm385, %v334, 0
        %v405 = vsel %vm385, %v335, 0
        %v408 = vsel %vm385, %v336, 0
        %410 = vmatpush.msra.mxu0 0.0
        %411 = vmatpush.msra.mxu0 0.0
        %412 = vmatpush.msra.mxu0 0.0
        %413 = vmatpush.msra.mxu0 0.0
        %414 = vmatpush.msra.mxu0 0.0
        %415 = vmatpush.msra.mxu0 0.0
        %416 = vmatpush.msra.mxu0 0.0
        %417 = vmatpush.msra.mxu0 0.0
        %418 = vmatpush.msra.mxu0 0.0
        %419 = vmatpush.msra.mxu0 0.0
        %420 = vmatpush.msra.mxu0 0.0
        %421 = vmatpush.msra.mxu0 0.0
        %422 = vmatpush.msra.mxu0 0.0
        %423 = vmatpush.msra.mxu0 0.0
        %424 = vmatpush.msra.mxu0 0.0
        %425 = vmatpush.msra.mxu0 %v328
        %426 = vmatmul.f32.gmra.mxu0 %v387
        %v427 = vpop.f32.mrf.mxu0
        %v428 = vadd.f32 %v348, %v427
        %429 = vmatmul.f32.gmra.mxu0 %v390
        %v430 = vpop.f32.mrf.mxu0
        %v431 = vadd.f32 %v353, %v430
        %432 = vmatmul.f32.gmra.mxu0 %v393
        %v433 = vpop.f32.mrf.mxu0
        %v434 = vadd.f32 %v358, %v433
        %435 = vmatmul.f32.gmra.mxu0 %v396
        %v436 = vpop.f32.mrf.mxu0
        %v437 = vadd.f32 %v363, %v436
        %438 = vmatmul.f32.gmra.mxu0 %v399
        %v439 = vpop.f32.mrf.mxu0
        %v440 = vadd.f32 %v368, %v439
        %441 = vmatmul.f32.gmra.mxu0 %v402
        %v442 = vpop.f32.mrf.mxu0
        %v443 = vadd.f32 %v373, %v442
        %444 = vmatmul.f32.gmra.mxu0 %v405
        %v445 = vpop.f32.mrf.mxu0
        %v446 = vadd.f32 %v378, %v445
        %447 = vmatmul.f32.gmra.mxu0 %v408
        %v448 = vpop.f32.mrf.mxu0
        %v449 = vadd.f32 %v383, %v448
        %450 = vdwg.mxu0
        %v451 = vmax.f32 %v428, 0.0
        %v452 = vmax.f32 %v431, 0.0
        %v453 = vmax.f32 %v434, 0.0
        %v454 = vmax.f32 %v437, 0.0
        %v455 = vmax.f32 %v440, 0.0
        %v456 = vmax.f32 %v443, 0.0
        %v457 = vmax.f32 %v446, 0.0
        %v458 = vmax.f32 %v449, 0.0
        %v459 = vld [vmem:[%s3] sm:$0xff]
        %v460 = vld [vmem:[%s3 + $0x8] sm:$0xff]
        %v461 = vld [vmem:[%s3 + $0x10] sm:$0xff]
        %v462 = vld [vmem:[%s3 + $0x18] sm:$0xff]
        %v463 = vld [vmem:[%s4] sm:$0xff]
        %v464 = vld [vmem:[%s4 + $0x8] sm:$0xff]
        %v465 = vld [vmem:[%s4 + $0x10] sm:$0xff]
        %v466 = vld [vmem:[%s4 + $0x18] sm:$0xff]
        %468 = vset.pattern.permute.xlu0 0
        %469 = vperm.xlu0 %468, %v463
        %v470 = vpop.permute.xlu0 %469
        %473 = vset.pattern.permute.xlu0 0
        %474 = vperm.xlu0 %473, %v464
        %v475 = vpop.permute.xlu0 %474
        %478 = vset.pattern.permute.xlu0 0
        %479 = vperm.xlu0 %478, %v465
        %v480 = vpop.permute.xlu0 %479
        %483 = vset.pattern.permute.xlu0 0
        %484 = vperm.xlu0 %483, %v466
        %v485 = vpop.permute.xlu0 %484
        %vm487 = vcmask 523264
        %v489 = vsel %vm487, %v459, 0
        %v492 = vsel %vm487, %v460, 0
        %v495 = vsel %vm487, %v461, 0
        %v498 = vsel %vm487, %v462, 0
        %500 = vmatpush.msra.mxu0 0.0
        %501 = vmatpush.msra.mxu0 0.0
        %502 = vmatpush.msra.mxu0 0.0
        %503 = vmatpush.msra.mxu0 0.0
        %504 = vmatpush.msra.mxu0 0.0
        %505 = vmatpush.msra.mxu0 0.0
        %506 = vmatpush.msra.mxu0 0.0
        %507 = vmatpush.msra.mxu0 0.0
        %508 = vmatpush.msra.mxu0 %v458
        %509 = vmatpush.msra.mxu0 %v457
        %510 = vmatpush.msra.mxu0 %v456
        %511 = vmatpush.msra.mxu0 %v455
        %512 = vmatpush.msra.mxu0 %v454
        %513 = vmatpush.msra.mxu0 %v453
        %514 = vmatpush.msra.mxu0 %v452
        %515 = vmatpush.msra.mxu0 %v451
        %516 = vmatmul.f32.gmra.mxu0 %v489
        %v517 = vpop.f32.mrf.mxu0
        %v518 = vadd.f32 %v470, %v517
        %519 = vmatmul.f32.gmra.mxu0 %v492
        %v520 = vpop.f32.mrf.mxu0
        %v521 = vadd.f32 %v475, %v520
        %522 = vmatmul.f32.gmra.mxu0 %v495
        %v523 = vpop.f32.mrf.mxu0
        %v524 = vadd.f32 %v480, %v523
        %525 = vmatmul.f32.gmra.mxu0 %v498
        %v526 = vpop.f32.mrf.mxu0
        %v527 = vadd.f32 %v485, %v526
        %528 = vdwg.mxu0
        %v529 = vmax.f32 %v518, 0.0
        %v530 = vmax.f32 %v521, 0.0
        %v531 = vmax.f32 %v524, 0.0
        %v532 = vmax.f32 %v527, 0.0
        %v533 = vld [vmem:[%s5] sm:$0xff]
        %v534 = vld [vmem:[%s5 + $0x8] sm:$0xff]
        %v535 = vld [vmem:[%s6] sm:$0xff]
        %v536 = vld [vmem:[%s6 + $0x8] sm:$0xff]
        %538 = vset.pattern.permute.xlu0 0
        %539 = vperm.xlu0 %538, %v535
        %v540 = vpop.permute.xlu0 %539
        %543 = vset.pattern.permute.xlu0 0
        %544 = vperm.xlu0 %543, %v536
        %v545 = vpop.permute.xlu0 %544
        %vm547 = vcmask 261120
        %v549 = vsel %vm547, %v533, 0
        %v552 = vsel %vm547, %v534, 0
        %554 = vmatpush.msra.mxu0 0.0
        %555 = vmatpush.msra.mxu0 0.0
        %556 = vmatpush.msra.mxu0 0.0
        %557 = vmatpush.msra.mxu0 0.0
        %558 = vmatpush.msra.mxu0 0.0
        %559 = vmatpush.msra.mxu0 0.0
        %560 = vmatpush.msra.mxu0 0.0
        %561 = vmatpush.msra.mxu0 0.0
        %562 = vmatpush.msra.mxu0 0.0
        %563 = vmatpush.msra.mxu0 0.0
        %564 = vmatpush.msra.mxu0 0.0
        %565 = vmatpush.msra.mxu0 0.0
        %566 = vmatpush.msra.mxu0 %v532
        %567 = vmatpush.msra.mxu0 %v531
        %568 = vmatpush.msra.mxu0 %v530
        %569 = vmatpush.msra.mxu0 %v529
        %570 = vmatmul.f32.gmra.mxu0 %v549
        %v571 = vpop.f32.mrf.mxu0
        %v572 = vadd.f32 %v540, %v571
        %573 = vmatmul.f32.gmra.mxu0 %v552
        %v574 = vpop.f32.mrf.mxu0
        %v575 = vadd.f32 %v545, %v574
        %576 = vdwg.mxu0
        %v577 = vmax.f32 %v572, 0.0
        %v578 = vmax.f32 %v575, 0.0
        %v579 = vld [vmem:[%s7] sm:$0xff]
        %v580 = vld [vmem:[%s8] sm:$0xff]
        %582 = vset.pattern.permute.xlu0 0
        %583 = vperm.xlu0 %582, %v580
        %v584 = vpop.permute.xlu0 %583
        %vm586 = vcmask 130048
        %v588 = vsel %vm586, %v579, 0
        %590 = vmatpush.msra.mxu0 0.0
        %591 = vmatpush.msra.mxu0 0.0
        %592 = vmatpush.msra.mxu0 0.0
        %593 = vmatpush.msra.mxu0 0.0
        %594 = vmatpush.msra.mxu0 0.0
        %595 = vmatpush.msra.mxu0 0.0
        %596 = vmatpush.msra.mxu0 0.0
        %597 = vmatpush.msra.mxu0 0.0
        %598 = vmatpush.msra.mxu0 0.0
        %599 = vmatpush.msra.mxu0 0.0
        %600 = vmatpush.msra.mxu0 0.0
        %601 = vmatpush.msra.mxu0 0.0
        %602 = vmatpush.msra.mxu0 0.0
        %603 = vmatpush.msra.mxu0 0.0
        %604 = vmatpush.msra.mxu0 %v578
        %605 = vmatpush.msra.mxu0 %v577
        %606 = vmatmul.f32.gmra.mxu0 %v588
        %v607 = vpop.f32.mrf.mxu0
        %v608 = vadd.f32 %v584, %v607
        %609 = vdwg.mxu0
        %v610 = vadd.f32 %v328, %v608
        %611 = vst [vmem:[%s323] sm:$0xff] %v610
        %s612 = sand.u32 %s225, 1
        %s613 = scalar_lea.sflag [#allocation3], %s612
        %s614 = sand.u32 %s225, 1
        %s615 = smul.addr %s614, 8
        %s616 = scalar_lea.vmem [#allocation2], %s615
        // Predicated region
        $region57: #{tpu_custom_call.1} parent=55 // pred_check
          %p617 = pneg %p235
        $region58: #{tpu_custom_call.1} parent=55 // pred_check_branch
          %619 = sbr.rel (%p617) target = $region60
        $region59: #{tpu_custom_call.1} parent=55 // pred_region
          %621 = vsyncadd %s613, 0
          %s622 = smul.addr %s23, 8
          %s623 = scalar_lea.hbm %s9, %s622
          %s625 = sshll.u32 %s616, 4
          %s626 = int_to_ptr.vmem [resolvable:$true] %s625
          %s627 = sshll.u32 %s623, 4
          %s628 = int_to_ptr.hbm [resolvable:$true] %s627
          %630 = dma.vmem_to_hbm [thread:$0]  %s626, 128, %s628, %s613
        $region60: #{tpu_custom_call.1} parent=55 // pred_fallthru
          _
      $region56: #{tpu_custom_call.1} parent=5 // pred_fallthru
        _
      %p631 = scmp.le.s32.totalorder 2, %s18
      // Predicated region
      $region61: #{tpu_custom_call.1} parent=5 // pred_check
        %p632 = pneg %p631
      $region62: #{tpu_custom_call.1} parent=5 // pred_check_branch
        %634 = sbr.rel (%p632) target = $region64
      $region63: #{tpu_custom_call.1} parent=5 // pred_region
        %s635 = ssub.s32 %s18, 2
        // Predicated region
        $region65: #{tpu_custom_call.1} parent=63 // pred_check
          %p636 = pneg %p241
        $region66: #{tpu_custom_call.1} parent=63 // pred_check_branch
          %638 = sbr.rel (%p636) target = $region68
        $region67: #{tpu_custom_call.1} parent=63 // pred_region
          %s639 = sand.u32 %s226, 1
          %s640 = scalar_lea.sflag [#allocation3], %s639
          %s641 = sand.u32 %s226, 1
          %s642 = smul.addr %s641, 8
          %s643 = scalar_lea.vmem [#allocation2], %s642
          %645 = dma.done %s640, 128
        $region68: #{tpu_custom_call.1} parent=63 // pred_fallthru
          _
      $region64: #{tpu_custom_call.1} parent=5 // pred_fallthru
        _
    $region6: #{tpu_custom_call.1} parent=1 // loop_footer
      %s22 = sadd.s32 1, %s18
    $region7: #{tpu_custom_call.1} parent=1 // loop_footer_branch
      %17 = sbr.rel target = $region3
    $region8: #{tpu_custom_call.1} parent=1 // loop_exit
      _
    %646 = vsyncpa [#allocation3], 1
    %s647 = scalar_lea.sflag [#allocation3], 1
    %648 = vsyncpa %s647, 1

</llo_original>
